<compile_context>
chip_gen: v6e
topology: v6e:2x2x1
jax: 0.10.0
libtpu: 0.0.40
codegen_flags: <defaults>
</compile_context>

<pallas_src>
import math

import jax
import jax.numpy as jnp
from jax.experimental import pallas as pl
from jax.experimental.pallas import tpu as pltpu

# ----- small, module-consistent config -----------------------------------
B = 2                    # batch
T = 8                    # sequence length
D_MODEL = 32             # config.d_model
D_HIDDEN = 4 * D_MODEL   # 4 * d_model = 128 (lane-dense hidden dim)

_ROW_TILE = 256          # row tile used only when B*T is large enough


def _mlp_kernel(x_ref, fc_ref, proj_ref, o_ref):
    """Fused MLP over one row-tile (or the whole flattened batch).

    x_ref:    (M, C)        VMEM
    fc_ref:   (C+1, 4C)     VMEM   rows 0..C-1 = c_fc.weight^T, row C = c_fc.bias
    proj_ref: (4C+1, C)     VMEM   rows 0..4C-1 = c_proj.weight^T, row 4C = bias
    o_ref:    (M, C)        VMEM
    """
    c_in = fc_ref.shape[0] - 1      # C   (static)
    h_dim = proj_ref.shape[0] - 1   # 4C  (static)

    x = x_ref[...]                                   # (M, C)

    w_fc = fc_ref[:c_in, :]                          # (C, 4C)
    b_fc = fc_ref[c_in:c_in + 1, :]                  # (1, 4C)
    w_proj = proj_ref[:h_dim, :]                     # (4C, C)
    b_proj = proj_ref[h_dim:h_dim + 1, :]            # (1, C)

    # c_fc:  h = x @ W_fc^T + b_fc
    h = jnp.dot(x, w_fc, preferred_element_type=jnp.float32) + b_fc

    # GELU, tanh approximation (matches torch.nn.GELU(approximate='tanh')):
    #   0.5 * h * (1 + tanh( c*(h + 0.044715*h^3) ))
    # refactored as h*(c1 + c2*h*h) to drop one vmul per element.
    c1 = jnp.float32(math.sqrt(2.0 / math.pi))
    c2 = jnp.float32(0.044715 * math.sqrt(2.0 / math.pi))
    g = 0.5 * h * (1.0 + jnp.tanh(h * (c1 + c2 * (h * h))))

    # c_proj:  out = g @ W_proj^T + b_proj
    out = jnp.dot(g, w_proj, preferred_element_type=jnp.float32) + b_proj

    o_ref[...] = out.astype(o_ref.dtype)
    # TODO(synk): at d_model=32 the output store uses only 32/128 lanes
    # (masked vst); pad C to 128 at the kernel boundary if this config ever
    # grows beyond toy size.


def pack_params(w_fc, b_fc, w_proj, b_proj):
    """One-time parameter packing (hoisted out of the per-call path).

    PyTorch layout in:  w_fc (4C, C), b_fc (4C,), w_proj (C, 4C), b_proj (C,)
    Returns:
      fc_packed   (C+1, 4C)  = [w_fc^T ; b_fc]
      proj_packed (4C+1, C)  = [w_proj^T ; b_proj]
    """
    fc_packed = jnp.concatenate([w_fc.T, b_fc[None, :]], axis=0)
    proj_packed = jnp.concatenate([w_proj.T, b_proj[None, :]], axis=0)
    return fc_packed, proj_packed


@jax.jit
def mlp_forward(x, fc_packed, proj_packed):
    """x: (B, T, C) float32; packed params from pack_params.  -> (B, T, C)."""
    Bx, Tx, Cx = x.shape
    h_dim = fc_packed.shape[1]
    n = Bx * Tx
    x2d = x.reshape(n, Cx)

    if n >= 2 * _ROW_TILE and n % _ROW_TILE == 0:
        # Real-sized batch: row grid, weights broadcast to every step, rows
        # split across TensorCores (v7x) via "parallel" semantics.
        out2d = pl.pallas_call(
            _mlp_kernel,
            out_shape=jax.ShapeDtypeStruct((n, Cx), jnp.float32),
            grid=(n // _ROW_TILE,),
            in_specs=[
                pl.BlockSpec((_ROW_TILE, Cx), lambda i: (i, 0)),
                pl.BlockSpec((Cx + 1, h_dim), lambda i: (0, 0)),
                pl.BlockSpec((h_dim + 1, Cx), lambda i: (0, 0)),
            ],
            out_specs=pl.BlockSpec((_ROW_TILE, Cx), lambda i: (i, 0)),
            compiler_params=pltpu.CompilerParams(
                dimension_semantics=("parallel",)),
        )(x2d, fc_packed, proj_packed)
    else:
        # Toy size: single invocation, everything resident in VMEM, 3 DMAs.
        out2d = pl.pallas_call(
            _mlp_kernel,
            out_shape=jax.ShapeDtypeStruct((n, Cx), jnp.float32),
            in_specs=[
                pl.BlockSpec(memory_space=pltpu.MemorySpace.VMEM),  # x
                pl.BlockSpec(memory_space=pltpu.MemorySpace.VMEM),  # fc_packed
                pl.BlockSpec(memory_space=pltpu.MemorySpace.VMEM),  # proj_packed
            ],
            out_specs=pl.BlockSpec(memory_space=pltpu.MemorySpace.VMEM),
        )(x2d, fc_packed, proj_packed)

    return out2d.reshape(Bx, Tx, Cx)


def _reference(x, w_fc, b_fc, w_proj, b_proj):
    """Pure-JAX reference replicating the PyTorch MLP forward exactly."""
    h = x @ w_fc.T + b_fc
    g = jax.nn.gelu(h, approximate=True)   # tanh approximation, same as torch
    return g @ w_proj.T + b_proj


if __name__ == "__main__":
    key = jax.random.PRNGKey(0)
    kx, k1, k2, k3, k4 = jax.random.split(key, 5)

    # deterministic parameter init (shapes match nn.Linear in the module)
    bound_fc = 1.0 / math.sqrt(D_MODEL)
    bound_proj = 1.0 / math.sqrt(D_HIDDEN)
    w_fc = jax.random.uniform(k1, (D_HIDDEN, D_MODEL), jnp.float32,
                              -bound_fc, bound_fc)
    b_fc = jax.random.uniform(k2, (D_HIDDEN,), jnp.float32,
                              -bound_fc, bound_fc)
    w_proj = jax.random.uniform(k3, (D_MODEL, D_HIDDEN), jnp.float32,
                                -bound_proj, bound_proj)
    b_proj = jax.random.uniform(k4, (D_MODEL,), jnp.float32,
                                -bound_proj, bound_proj)

    x = jax.random.normal(kx, (B, T, D_MODEL), jnp.float32)

    # Pack/transpose parameters ONCE (init-time), then call the jitted forward.
    fc_packed, proj_packed = pack_params(w_fc, b_fc, w_proj, b_proj)
    fc_packed = jax.block_until_ready(fc_packed)
    proj_packed = jax.block_until_ready(proj_packed)

    out = mlp_forward(x, fc_packed, proj_packed)
    out = jax.block_until_ready(out)

    ref = _reference(x, w_fc, b_fc, w_proj, b_proj)
    assert out.shape == (B, T, D_MODEL)
    assert jnp.allclose(out, ref, atol=1e-4, rtol=1e-4), "mismatch vs reference"

    print("KERNEL_OK")
</pallas_src>

<mosaic_0001>
module attributes {stable_mosaic.version = 11 : i64} {
  func.func @_mlp_kernel(%arg0: memref<16x32xf32, #tpu.memory_space<vmem>>, %arg1: memref<33x128xf32, #tpu.memory_space<vmem>>, %arg2: memref<129x32xf32, #tpu.memory_space<vmem>>, %arg3: memref<16x32xf32, #tpu.memory_space<vmem>>) attributes {dimension_semantics = [], scalar_prefetch = 0 : i64, scratch_operands = 0 : i64, tpu.core_type = #tpu.core_type<tc>} {
    %c0 = arith.constant 0 : index
    %c0_0 = arith.constant 0 : index
    %0 = vector.load %arg0[%c0, %c0_0] : memref<16x32xf32, #tpu.memory_space<vmem>>, vector<16x32xf32>
    %c0_1 = arith.constant 0 : index
    %c0_2 = arith.constant 0 : index
    %1 = vector.load %arg1[%c0_1, %c0_2] : memref<33x128xf32, #tpu.memory_space<vmem>>, vector<32x128xf32>
    %c32 = arith.constant 32 : index
    %c0_3 = arith.constant 0 : index
    %2 = vector.load %arg1[%c32, %c0_3] : memref<33x128xf32, #tpu.memory_space<vmem>>, vector<1x128xf32>
    %c0_4 = arith.constant 0 : index
    %c0_5 = arith.constant 0 : index
    %3 = vector.load %arg2[%c0_4, %c0_5] : memref<129x32xf32, #tpu.memory_space<vmem>>, vector<128x32xf32>
    %c128 = arith.constant 128 : index
    %c0_6 = arith.constant 0 : index
    %4 = vector.load %arg2[%c128, %c0_6] : memref<129x32xf32, #tpu.memory_space<vmem>>, vector<1x32xf32>
    %cst = arith.constant dense<0.000000e+00> : vector<16x128xf32>
    %5 = tpu.matmul %0, %1, %cst {dimension_numbers = #tpu.dot_dimension_numbers<[1], [0], [0], [1], [0, 0, 1, 1], [], []>} : vector<16x32xf32>, vector<32x128xf32>, vector<16x128xf32> -> vector<16x128xf32>
    %6 = vector.broadcast %2 : vector<1x128xf32> to vector<16x128xf32>
    %7 = arith.addf %5, %6 : vector<16x128xf32>
    %cst_7 = arith.constant 5.000000e-01 : f32
    %8 = vector.broadcast %cst_7 : f32 to vector<16x128xf32>
    %9 = arith.mulf %8, %7 : vector<16x128xf32>
    %10 = arith.mulf %7, %7 : vector<16x128xf32>
    %cst_8 = arith.constant 0.0356774069 : f32
    %11 = vector.broadcast %cst_8 : f32 to vector<16x128xf32>
    %12 = arith.mulf %11, %10 : vector<16x128xf32>
    %cst_9 = arith.constant 0.797884583 : f32
    %13 = vector.broadcast %cst_9 : f32 to vector<16x128xf32>
    %14 = arith.addf %13, %12 : vector<16x128xf32>
    %15 = arith.mulf %7, %14 : vector<16x128xf32>
    %16 = math.tanh %15 : vector<16x128xf32>
    %cst_10 = arith.constant 1.000000e+00 : f32
    %17 = vector.broadcast %cst_10 : f32 to vector<16x128xf32>
    %18 = arith.addf %17, %16 : vector<16x128xf32>
    %19 = arith.mulf %9, %18 : vector<16x128xf32>
    %cst_11 = arith.constant dense<0.000000e+00> : vector<16x32xf32>
    %20 = tpu.matmul %19, %3, %cst_11 {dimension_numbers = #tpu.dot_dimension_numbers<[1], [0], [0], [1], [0, 0, 1, 1], [], []>} : vector<16x128xf32>, vector<128x32xf32>, vector<16x32xf32> -> vector<16x32xf32>
    %21 = vector.broadcast %4 : vector<1x32xf32> to vector<16x32xf32>
    %22 = arith.addf %20, %21 : vector<16x32xf32>
    %c0_12 = arith.constant 0 : index
    %c0_13 = arith.constant 0 : index
    %23 = vector.load %arg3[%c0_12, %c0_13] : memref<16x32xf32, #tpu.memory_space<vmem>>, vector<16x32xf32>
    tpu.vector_store %arg3[%c0_12, %c0_13], %22 {strides = array<i32>} : memref<16x32xf32, #tpu.memory_space<vmem>>, vector<16x32xf32>,
    return
  }
}

</mosaic_0001>

<llo_original>
// kernel: mlp_forward.1
$region0: #{mlp_forward.1}
  #allocation0 [shape = 'u32[]', space=smem, size = 0x4, offset = 0x4, fixed_abs, tag = 'smem constant byte address 0x4 - core index']
  #allocation1 [shape = 'u32[144,128]{1,0:T(1,128)}', space=vmem, size = 0x12000, scoped, tag = 'internal scratch']
  %s0 = inlined_call_operand.vmem [shape: f32[16,32], index: 0, kind: input, shape index: {}]
  %s1 = inlined_call_operand.vmem [shape: f32[33,128], index: 1, kind: input, shape index: {}]
  %s2 = inlined_call_operand.vmem [shape: f32[129,32], index: 2, kind: input, shape index: {}]
  %s3 = inlined_call_operand.hbm [shape: f32[16,32], index: 3, kind: output, shape index: {}]
  %s4 = sld [smem:[#allocation0]]
  $region22: #{mlp_forward.1} parent=0
    _
  %s6 = ssub.s32 1, %s4
  %s7 = scalar_select 0, %s6, %s4
  $region1: #{mlp_forward.1} parent=0
    #allocation2 [shape = 'u8[8192]{0}', space=vmem, size = 0x2000, scoped, tag = 'output window, operand 0, single buffered']
    #allocation3 [shape = 's32[1]{0}', space=sflag, size = 0x4, scoped, tag = 'scoped memory for mlp_forward.1']
    %8 = vsyncpa [#allocation3], 0
    // Predicated region
    $region2: #{mlp_forward.1} parent=1 // pred_check
      _
    $region3: #{mlp_forward.1} parent=1 // pred_check_branch
      %10 = sbr.rel (0) target = $region5
    $region4: #{mlp_forward.1} parent=1 // pred_region
      _
    $region5: #{mlp_forward.1} parent=1 // pred_fallthru
      _
    // Predicated region
    $region6: #{mlp_forward.1} parent=1 // pred_check
      _
    $region7: #{mlp_forward.1} parent=1 // pred_check_branch
      %12 = sbr.rel (0) target = $region9
    $region8: #{mlp_forward.1} parent=1 // pred_region
      _
    $region9: #{mlp_forward.1} parent=1 // pred_fallthru
      _
    // Predicated region
    $region10: #{mlp_forward.1} parent=1 // pred_check
      _
    $region11: #{mlp_forward.1} parent=1 // pred_check_branch
      %14 = sbr.rel (0) target = $region13
    $region12: #{mlp_forward.1} parent=1 // pred_region
      _
    $region13: #{mlp_forward.1} parent=1 // pred_fallthru
      _
    %v15 = vld [vmem:[%s0] sm:$0xff]
    %v16 = vld [vmem:[%s0 + $0x8] sm:$0xff]
    %v17 = vld [vmem:[%s1] sm:$0xff]
    %v18 = vld [vmem:[%s1 + $0x8] sm:$0xff]
    %v19 = vld [vmem:[%s1 + $0x10] sm:$0xff]
    %v20 = vld [vmem:[%s1 + $0x18] sm:$0xff]
    %v21 = vld [vmem:[%s1 + $0x20] sm:$0x1]
    %v22 = vld [vmem:[%s2] sm:$0xff]
    %v23 = vld [vmem:[%s2 + $0x8] sm:$0xff]
    %v24 = vld [vmem:[%s2 + $0x10] sm:$0xff]
    %v25 = vld [vmem:[%s2 + $0x18] sm:$0xff]
    %v26 = vld [vmem:[%s2 + $0x20] sm:$0xff]
    %v27 = vld [vmem:[%s2 + $0x28] sm:$0xff]
    %v28 = vld [vmem:[%s2 + $0x30] sm:$0xff]
    %v29 = vld [vmem:[%s2 + $0x38] sm:$0xff]
    %v30 = vld [vmem:[%s2 + $0x40] sm:$0xff]
    %v31 = vld [vmem:[%s2 + $0x48] sm:$0xff]
    %v32 = vld [vmem:[%s2 + $0x50] sm:$0xff]
    %v33 = vld [vmem:[%s2 + $0x58] sm:$0xff]
    %v34 = vld [vmem:[%s2 + $0x60] sm:$0xff]
    %v35 = vld [vmem:[%s2 + $0x68] sm:$0xff]
    %v36 = vld [vmem:[%s2 + $0x70] sm:$0xff]
    %v37 = vld [vmem:[%s2 + $0x78] sm:$0xff]
    %v38 = vld [vmem:[%s2 + $0x80] sm:$0x1]
    %v39 = vlaneseq
    %v40 = vshrl.u32 %v39, 7
    %v41 = vsub.s32 0, %v40
    %v42 = vrot.slane %v21, %v41
    %vm43 = vcmask 261120
    %v45 = vsel %vm43, %v15, 0
    %v48 = vsel %vm43, %v16, 0
    %50 = vmatprep.subr.mxu0 0.0
    %51 = vmatpush1.msra.mxu0 0.0
    %52 = vmatprep.subr.mxu0 0.0
    %53 = vmatpush1.msra.mxu0 0.0
    %54 = vmatprep.subr.mxu0 0.0
    %55 = vmatpush1.msra.mxu0 0.0
    %56 = vmatprep.subr.mxu0 0.0
    %57 = vmatpush1.msra.mxu0 0.0
    %58 = vmatprep.subr.mxu0 0.0
    %59 = vmatpush1.msra.mxu0 0.0
    %60 = vmatprep.subr.mxu0 0.0
    %61 = vmatpush1.msra.mxu0 0.0
    %62 = vmatprep.subr.mxu0 0.0
    %63 = vmatpush1.msra.mxu0 0.0
    %64 = vmatprep.subr.mxu0 0.0
    %65 = vmatpush1.msra.mxu0 0.0
    %66 = vmatprep.subr.mxu0 0.0
    %67 = vmatpush1.msra.mxu0 0.0
    %68 = vmatprep.subr.mxu0 0.0
    %69 = vmatpush1.msra.mxu0 0.0
    %70 = vmatprep.subr.mxu0 0.0
    %71 = vmatpush1.msra.mxu0 0.0
    %72 = vmatprep.subr.mxu0 0.0
    %73 = vmatpush1.msra.mxu0 0.0
    %74 = vmatprep.subr.mxu0 0.0
    %75 = vmatpush1.msra.mxu0 %v20
    %76 = vmatprep.subr.mxu0 0.0
    %77 = vmatpush1.msra.mxu0 %v19
    %78 = vmatprep.subr.mxu0 0.0
    %79 = vmatpush1.msra.mxu0 %v18
    %80 = vmatprep.subr.mxu0 0.0
    %81 = vmatpush1.msra.mxu0 %v17
    %82 = vmatprep.subr.mxu0 0.0
    %83 = vmatpush2.msra.mxu0 0.0
    %84 = vmatprep.subr.mxu0 0.0
    %85 = vmatpush2.msra.mxu0 0.0
    %86 = vmatprep.subr.mxu0 0.0
    %87 = vmatpush2.msra.mxu0 0.0
    %88 = vmatprep.subr.mxu0 0.0
    %89 = vmatpush2.msra.mxu0 0.0
    %90 = vmatprep.subr.mxu0 0.0
    %91 = vmatpush2.msra.mxu0 0.0
    %92 = vmatprep.subr.mxu0 0.0
    %93 = vmatpush2.msra.mxu0 0.0
    %94 = vmatprep.subr.mxu0 0.0
    %95 = vmatpush2.msra.mxu0 0.0
    %96 = vmatprep.subr.mxu0 0.0
    %97 = vmatpush2.msra.mxu0 0.0
    %98 = vmatprep.subr.mxu0 0.0
    %99 = vmatpush2.msra.mxu0 0.0
    %100 = vmatprep.subr.mxu0 0.0
    %101 = vmatpush2.msra.mxu0 0.0
    %102 = vmatprep.subr.mxu0 0.0
    %103 = vmatpush2.msra.mxu0 0.0
    %104 = vmatprep.subr.mxu0 0.0
    %105 = vmatpush2.msra.mxu0 0.0
    %106 = vmatprep.subr.mxu0 0.0
    %107 = vmatpush2.msra.mxu0 0.0
    %108 = vmatprep.subr.mxu0 0.0
    %109 = vmatpush2.msra.mxu0 0.0
    %110 = vmatprep.subr.mxu0 0.0
    %111 = vmatpush2.msra.mxu0 0.0
    %112 = vmatprep.subr.mxu0 0.0
    %113 = vmatpush2.msra.mxu0 0.0
    %114 = vmatprep.mubr.f32.mxu0 0.0
    %115 = vmatmul.mubr.f32.gmra.mxu0 %v45
    %v116 = vpop.f32.mrf.mxu0
    %v117 = vadd.f32 %v42, %v116
    %v118 = vpop.f32.mrf.mxu0
    %119 = vmatprep.mubr.f32.mxu0 0.0
    %120 = vmatmul.mubr.f32.gmra.mxu0 %v48
    %v121 = vpop.f32.mrf.mxu0
    %v122 = vadd.f32 %v42, %v121
    %v123 = vpop.f32.mrf.mxu0
    %124 = vdwg.mxu0
    %v125 = vmul.f32 %v117, 0.5
    %v126 = vmul.f32 %v122, 0.5
    %v127 = vmul.f32 %v117, %v117
    %v128 = vmul.f32 %v122, %v122
    %v129 = vmul.f32 %v127, 0.035677407
    %v130 = vmul.f32 %v128, 0.035677407
    %v131 = vadd.f32 %v129, 0.7978846
    %v132 = vadd.f32 %v130, 0.7978846
    %v133 = vmul.f32 %v117, %v131
    %v134 = vmul.f32 %v122, %v132
    %v135 = vtanh.pop %v133
    %v136 = vtanh.pop %v134
    %v137 = vadd.f32 %v135, 1.0
    %v138 = vadd.f32 %v136, 1.0
    %v139 = vmul.f32 %v125, %v137
    %v140 = vmul.f32 %v126, %v138
    %v141 = vlaneseq
    %v142 = vshrl.u32 %v141, 7
    %v143 = vsub.s32 0, %v142
    %v144 = vrot.slane %v38, %v143
    %145 = vmatprep.subr.mxu0 0.0
    %146 = vmatpush1.msra.mxu0 %v37
    %147 = vmatprep.subr.mxu0 0.0
    %148 = vmatpush1.msra.mxu0 %v36
    %149 = vmatprep.subr.mxu0 0.0
    %150 = vmatpush1.msra.mxu0 %v35
    %151 = vmatprep.subr.mxu0 0.0
    %152 = vmatpush1.msra.mxu0 %v34
    %153 = vmatprep.subr.mxu0 0.0
    %154 = vmatpush1.msra.mxu0 %v33
    %155 = vmatprep.subr.mxu0 0.0
    %156 = vmatpush1.msra.mxu0 %v32
    %157 = vmatprep.subr.mxu0 0.0
    %158 = vmatpush1.msra.mxu0 %v31
    %159 = vmatprep.subr.mxu0 0.0
    %160 = vmatpush1.msra.mxu0 %v30
    %161 = vmatprep.subr.mxu0 0.0
    %162 = vmatpush1.msra.mxu0 %v29
    %163 = vmatprep.subr.mxu0 0.0
    %164 = vmatpush1.msra.mxu0 %v28
    %165 = vmatprep.subr.mxu0 0.0
    %166 = vmatpush1.msra.mxu0 %v27
    %167 = vmatprep.subr.mxu0 0.0
    %168 = vmatpush1.msra.mxu0 %v26
    %169 = vmatprep.subr.mxu0 0.0
    %170 = vmatpush1.msra.mxu0 %v25
    %171 = vmatprep.subr.mxu0 0.0
    %172 = vmatpush1.msra.mxu0 %v24
    %173 = vmatprep.subr.mxu0 0.0
    %174 = vmatpush1.msra.mxu0 %v23
    %175 = vmatprep.subr.mxu0 0.0
    %176 = vmatpush1.msra.mxu0 %v22
    %177 = vmatprep.subr.mxu0 0.0
    %178 = vmatpush2.msra.mxu0 0.0
    %179 = vmatprep.subr.mxu0 0.0
    %180 = vmatpush2.msra.mxu0 0.0
    %181 = vmatprep.subr.mxu0 0.0
    %182 = vmatpush2.msra.mxu0 0.0
    %183 = vmatprep.subr.mxu0 0.0
    %184 = vmatpush2.msra.mxu0 0.0
    %185 = vmatprep.subr.mxu0 0.0
    %186 = vmatpush2.msra.mxu0 0.0
    %187 = vmatprep.subr.mxu0 0.0
    %188 = vmatpush2.msra.mxu0 0.0
    %189 = vmatprep.subr.mxu0 0.0
    %190 = vmatpush2.msra.mxu0 0.0
    %191 = vmatprep.subr.mxu0 0.0
    %192 = vmatpush2.msra.mxu0 0.0
    %193 = vmatprep.subr.mxu0 0.0
    %194 = vmatpush2.msra.mxu0 0.0
    %195 = vmatprep.subr.mxu0 0.0
    %196 = vmatpush2.msra.mxu0 0.0
    %197 = vmatprep.subr.mxu0 0.0
    %198 = vmatpush2.msra.mxu0 0.0
    %199 = vmatprep.subr.mxu0 0.0
    %200 = vmatpush2.msra.mxu0 0.0
    %201 = vmatprep.subr.mxu0 0.0
    %202 = vmatpush2.msra.mxu0 0.0
    %203 = vmatprep.subr.mxu0 0.0
    %204 = vmatpush2.msra.mxu0 0.0
    %205 = vmatprep.subr.mxu0 0.0
    %206 = vmatpush2.msra.mxu0 0.0
    %207 = vmatprep.subr.mxu0 0.0
    %208 = vmatpush2.msra.mxu0 0.0
    %209 = vmatprep.mubr.f32.mxu0 0.0
    %210 = vmatmul.mubr.f32.gmra.mxu0 %v139
    %v211 = vpop.f32.mrf.mxu0
    %v212 = vadd.f32 %v144, %v211
    %v213 = vpop.f32.mrf.mxu0
    %214 = vmatprep.mubr.f32.mxu0 0.0
    %215 = vmatmul.mubr.f32.gmra.mxu0 %v140
    %v216 = vpop.f32.mrf.mxu0
    %v217 = vadd.f32 %v144, %v216
    %v218 = vpop.f32.mrf.mxu0
    %219 = vdwg.mxu0
    %220 = vst.msk [vmem:[#allocation2] sm:$0xff] %vm43, %v212
    %221 = vst.msk [vmem:[#allocation2 + $0x8] sm:$0xff] %vm43, %v217
    // Predicated region
    $region14: #{mlp_forward.1} parent=1 // pred_check
      _
    $region15: #{mlp_forward.1} parent=1 // pred_check_branch
      %223 = sbr.rel (0) target = $region17
    $region16: #{mlp_forward.1} parent=1 // pred_region
      %s225 = ssub.s32 256, 256
      %226 = vsyncadd [#allocation3], %s225
      %s227 = sshll.u32 [#allocation2], 4
      %s228 = int_to_ptr.vmem [resolvable:$true] %s227
      %233 = dma.vmem_to_hbm [thread:$0]  %s228, 256, %s3, [#allocation3], 128, 128, 8
    $region17: #{mlp_forward.1} parent=1 // pred_fallthru
      _
    // Predicated region
    $region18: #{mlp_forward.1} parent=1 // pred_check
      _
    $region19: #{mlp_forward.1} parent=1 // pred_check_branch
      %235 = sbr.rel (0) target = $region21
    $region20: #{mlp_forward.1} parent=1 // pred_region
      %236 = dma.done [#allocation3], 256
    $region21: #{mlp_forward.1} parent=1 // pred_fallthru
      _
    %237 = vsyncpa [#allocation3], 1

</llo_original>
